<compile_context>
chip_gen: v6e
topology: v6e:2x2x1
jax: 0.10.0
libtpu: 0.0.40
codegen_flags: <defaults>
</compile_context>

<pallas_src>
import functools

import jax
import jax.numpy as jnp
from jax.experimental import pallas as pl
from jax.experimental.pallas import tpu as pltpu

HIDDEN_SIZE1 = 512


def _round_up(n, m):
    return ((n + m - 1) // m) * m


def _mlp_kernel(x_ref, w1_ref, b1_ref, w2_ref, b2_ref, o_ref):
    # fc1: [TB, F]bf16 @ [F, H]bf16 -> [TB, H]f32 on the MXU (single bf16 pass).
    h = jnp.dot(x_ref[...], w1_ref[...], preferred_element_type=jnp.float32)
    h = jnp.maximum(h + b1_ref[...], 0.0)                 # bias + ReLU (VPU)
    # fc4 (H -> 1): VPU multiply with the [1, H] weight row + lane reduction
    # (XLU).  VPU/XLU have slack while fc1 owns the MXU.
    y = jnp.sum(h * w2_ref[...], axis=-1) + b2_ref[0]     # [TB] f32
    # Relayout to the lane-dense [1, TB] output tile (TB is a 128-multiple,
    # so the store is a full unmasked vst).
    o_ref[...] = y.reshape(1, -1).astype(o_ref.dtype)


@functools.partial(jax.jit, static_argnames=("block_b",))
def neural_net_forward(x, w1, b1, w2, b2, *, block_b=2048):
    """Pallas implementation of NeuralNet.forward.

    x:  [B, F] float32
    w1: [F, H] float32   (transposed vs. torch fc1.weight [H, F])
    b1: [1, H] float32
    w2: [1, H] float32   (torch fc4.weight layout, used as a row)
    b2: [1]    float32
    returns: [B] float32  (matches out.squeeze(1))
    """
    B, F = x.shape
    H = w1.shape[1]
    if block_b % 128 != 0:
        raise ValueError("block_b must be a multiple of 128 "
                         "(sublane constraint + lane-dense output tile)")

    # Effective batch tile: never larger than the 128-rounded batch (so tiny
    # batches like the B=8 self-test use a single 128-row block instead of
    # padding to block_b), and split into >= 2 grid steps when possible so
    # both v7x TensorCores get work.
    b_rounded = _round_up(B, 128)
    eff_block = min(block_b, b_rounded)
    if eff_block == b_rounded and b_rounded >= 256:
        eff_block = _round_up(b_rounded // 2, 128)
    num_blocks = pl.cdiv(b_rounded, eff_block)
    b_pad = num_blocks * eff_block

    # bf16 fc1 operands; f32 accumulation in the kernel.  K = F = 32, so one
    # bf16 pass loses very little accuracy.
    x16 = x.astype(jnp.bfloat16)
    w1_16 = w1.astype(jnp.bfloat16)
    if b_pad != B:
        # Pad the batch; padded rows are computed and discarded below.
        x16 = jnp.pad(x16, ((0, b_pad - B), (0, 0)))

    # VMEM budget.  The dominant consumer is the [eff_block, H] f32
    # intermediate (h, h*w2), NOT the x tile or W1.  At eff_block=2048, H=512
    # this estimate is ~13 MiB; request 2x headroom, floor 32 MiB, cap 60 MiB
    # (v7x physical VMEM is 64 MiB per TC).
    est_vmem = (2 * eff_block * F * 2        # x tile, bf16, double-buffered
                + 2 * F * H * 2              # W1, bf16 (resident, 2 bufs)
                + 2 * 2 * H * 4              # b1 + w2 rows
                + 2 * eff_block * 4          # output tile, double-buffered
                + 3 * eff_block * H * 4)     # h / h*w2 f32 intermediates
    vmem_limit = int(min(max(2 * est_vmem, 32 << 20), 60 << 20))

    out = pl.pallas_call(
        _mlp_kernel,
        out_shape=jax.ShapeDtypeStruct((1, b_pad), jnp.float32),
        grid=(num_blocks,),
        in_specs=[
            pl.BlockSpec((eff_block, F), lambda i: (i, 0)),     # x batch tile
            pl.BlockSpec((F, H), lambda i: (0, 0)),             # W1 (resident)
            pl.BlockSpec((1, H), lambda i: (0, 0)),             # b1
            pl.BlockSpec((1, H), lambda i: (0, 0)),             # w2 row
            pl.BlockSpec(memory_space=pltpu.MemorySpace.SMEM),  # b2 scalar
        ],
        # (1, b_pad) slab, (1, eff_block) tile: full sublane dim + 128-multiple
        # lane dim -> unmasked lane-dense stores.
        out_specs=pl.BlockSpec((1, eff_block), lambda i: (0, i)),
        compiler_params=pltpu.CompilerParams(
            dimension_semantics=("parallel",),   # shards grid steps across v7x TCs
            vmem_limit_bytes=vmem_limit,
        ),
    )(x16, w1_16, b1, w2, b2)
    return out[0, :B]  # drop padding; matches torch out.squeeze(1)


def init_params(key, input_size, hidden_size1):
    """Deterministic init mimicking torch.nn.Linear (uniform +-1/sqrt(fan_in))."""
    k1, k2, k3, k4 = jax.random.split(key, 4)
    bound1 = 1.0 / jnp.sqrt(jnp.float32(input_size))
    bound2 = 1.0 / jnp.sqrt(jnp.float32(hidden_size1))
    w1 = jax.random.uniform(k1, (input_size, hidden_size1), jnp.float32,
                            -bound1, bound1)
    b1 = jax.random.uniform(k2, (1, hidden_size1), jnp.float32, -bound1, bound1)
    w2 = jax.random.uniform(k3, (1, hidden_size1), jnp.float32, -bound2, bound2)
    b2 = jax.random.uniform(k4, (1,), jnp.float32, -bound2, bound2)
    return w1, b1, w2, b2


def _ref_forward(x, w1, b1, w2, b2):
    h = jnp.maximum(x @ w1 + b1, 0.0)
    return h @ w2[0] + b2[0]


if __name__ == "__main__":
    key = jax.random.PRNGKey(0)
    kx, kx2, kp = jax.random.split(key, 3)

    input_size = 32  # X.shape[1] in the original script
    w1, b1, w2, b2 = init_params(kp, input_size, HIDDEN_SIZE1)

    # Small batch (single 128-row block, padded).
    batch = 8
    x = jax.random.normal(kx, (batch, input_size), jnp.float32)
    y = jax.block_until_ready(neural_net_forward(x, w1, b1, w2, b2))
    y_ref = _ref_forward(x, w1, b1, w2, b2)
    assert y.shape == (batch,)
    # Tolerance relaxed vs. 1e-5 because fc1 runs with bf16 operands.
    assert jnp.allclose(y, y_ref, atol=5e-2, rtol=5e-2), (
        float(jnp.max(jnp.abs(y - y_ref))))

    # Non-multiple batch exercising multi-block grid + lane-dense slab output.
    batch2 = 300
    x2 = jax.random.normal(kx2, (batch2, input_size), jnp.float32)
    y2 = jax.block_until_ready(neural_net_forward(x2, w1, b1, w2, b2))
    y2_ref = _ref_forward(x2, w1, b1, w2, b2)
    assert y2.shape == (batch2,)
    assert jnp.allclose(y2, y2_ref, atol=5e-2, rtol=5e-2), (
        float(jnp.max(jnp.abs(y2 - y2_ref))))

    print("KERNEL_OK")
</pallas_src>

<mosaic_0001>
module attributes {stable_mosaic.version = 11 : i64} {
  func.func @_mlp_kernel(%arg0: i32, %arg1: memref<128x32xbf16, #tpu.memory_space<vmem>>, %arg2: memref<32x512xbf16, #tpu.memory_space<vmem>>, %arg3: memref<1x512xf32, #tpu.memory_space<vmem>>, %arg4: memref<1x512xf32, #tpu.memory_space<vmem>>, %arg5: memref<1xf32, #tpu.memory_space<smem>>, %arg6: memref<1x128xf32, #tpu.memory_space<vmem>>) attributes {dimension_semantics = [#tpu.dimension_semantics<parallel>], iteration_bounds = array<i64: 1>, scalar_prefetch = 0 : i64, scratch_operands = 0 : i64, tpu.core_type = #tpu.core_type<tc>, window_params = [{transform_indices = @transform_0, window_bounds = array<i64: 128, 32>}, {pipeline_mode = #tpu.pipeline_mode<synchronous>, transform_indices = @transform_1, window_bounds = array<i64: 32, 512>}, {pipeline_mode = #tpu.pipeline_mode<synchronous>, transform_indices = @transform_2, window_bounds = array<i64: 1, 512>}, {pipeline_mode = #tpu.pipeline_mode<synchronous>, transform_indices = @transform_3, window_bounds = array<i64: 1, 512>}, {transform_indices = @transform_4, window_bounds = array<i64: 1>}, {transform_indices = @transform_5, window_bounds = array<i64: 1, 128>}]} {
    %c0 = arith.constant 0 : index
    %c0_0 = arith.constant 0 : index
    %0 = vector.load %arg1[%c0, %c0_0] : memref<128x32xbf16, #tpu.memory_space<vmem>>, vector<128x32xbf16>
    %c0_1 = arith.constant 0 : index
    %c0_2 = arith.constant 0 : index
    %1 = vector.load %arg2[%c0_1, %c0_2] : memref<32x512xbf16, #tpu.memory_space<vmem>>, vector<32x512xbf16>
    %cst = arith.constant dense<0.000000e+00> : vector<128x512xf32>
    %2 = tpu.matmul %0, %1, %cst {dimension_numbers = #tpu.dot_dimension_numbers<[1], [0], [0], [1], [0, 0, 1, 1], [], []>} : vector<128x32xbf16>, vector<32x512xbf16>, vector<128x512xf32> -> vector<128x512xf32>
    %c0_3 = arith.constant 0 : index
    %c0_4 = arith.constant 0 : index
    %3 = vector.load %arg3[%c0_3, %c0_4] : memref<1x512xf32, #tpu.memory_space<vmem>>, vector<1x512xf32>
    %4 = vector.broadcast %3 : vector<1x512xf32> to vector<128x512xf32>
    %5 = arith.addf %2, %4 : vector<128x512xf32>
    %cst_5 = arith.constant 0.000000e+00 : f32
    %6 = vector.broadcast %cst_5 : f32 to vector<128x512xf32>
    %7 = arith.maximumf %5, %6 : vector<128x512xf32>
    %c0_6 = arith.constant 0 : index
    %c0_7 = arith.constant 0 : index
    %8 = vector.load %arg4[%c0_6, %c0_7] : memref<1x512xf32, #tpu.memory_space<vmem>>, vector<1x512xf32>
    %9 = vector.broadcast %8 : vector<1x512xf32> to vector<128x512xf32>
    %10 = arith.mulf %7, %9 : vector<128x512xf32>
    %cst_8 = arith.constant dense<0.000000e+00> : vector<128xf32>
    %11 = vector.multi_reduction <add>, %10, %cst_8 [1] : vector<128x512xf32> to vector<128xf32>
    %c0_9 = arith.constant 0 : index
    %12 = memref.load %arg5[%c0_9] : memref<1xf32, #tpu.memory_space<smem>>
    %13 = vector.broadcast %12 : f32 to vector<128xf32>
    %14 = arith.addf %11, %13 : vector<128xf32>
    %15 = vector.shape_cast %14 : vector<128xf32> to vector<1x128xf32>
    %c0_10 = arith.constant 0 : index
    %c0_11 = arith.constant 0 : index
    %16 = vector.load %arg6[%c0_10, %c0_11] : memref<1x128xf32, #tpu.memory_space<vmem>>, vector<1x128xf32>
    tpu.vector_store %arg6[%c0_10, %c0_11], %15 {strides = array<i32>} : memref<1x128xf32, #tpu.memory_space<vmem>>, vector<1x128xf32>,
    return
  }
  func.func @transform_0(%arg0: i32) -> (i32, i32) {
    %c0_i32 = arith.constant 0 : i32
    %c0_i32_0 = arith.constant 0 : i32
    return %arg0, %c0_i32 : i32, i32
  }
  func.func @transform_1(%arg0: i32) -> (i32, i32) {
    %c0_i32 = arith.constant 0 : i32
    %c0_i32_0 = arith.constant 0 : i32
    %c0_i32_1 = arith.constant 0 : i32
    return %c0_i32, %c0_i32_0 : i32, i32
  }
  func.func @transform_2(%arg0: i32) -> (i32, i32) {
    %c0_i32 = arith.constant 0 : i32
    %c0_i32_0 = arith.constant 0 : i32
    %c0_i32_1 = arith.constant 0 : i32
    return %c0_i32, %c0_i32_0 : i32, i32
  }
  func.func @transform_3(%arg0: i32) -> (i32, i32) {
    %c0_i32 = arith.constant 0 : i32
    %c0_i32_0 = arith.constant 0 : i32
    %c0_i32_1 = arith.constant 0 : i32
    return %c0_i32, %c0_i32_0 : i32, i32
  }
  func.func @transform_4(%arg0: i32) -> i32 {
    %c0_i32 = arith.constant 0 : i32
    %c0_i32_0 = arith.constant 0 : i32
    return %c0_i32 : i32
  }
  func.func @transform_5(%arg0: i32) -> (i32, i32) {
    %c0_i32 = arith.constant 0 : i32
    %c0_i32_0 = arith.constant 0 : i32
    return %c0_i32, %arg0 : i32, i32
  }
}

</mosaic_0001>

<llo_original>
// kernel: neural_net_forward.1
$region0: #{neural_net_forward.1}
  #allocation0 [shape = 'u32[]', space=smem, size = 0x4, offset = 0x4, fixed_abs, tag = 'smem constant byte address 0x4 - core index']
  #allocation1 [shape = 'u32[144,128]{1,0:T(1,128)}', space=vmem, size = 0x12000, scoped, tag = 'internal scratch']
  #allocation2 [shape = 'f32[1]{0:T(128)S(6)}', space=smem, size = 0x200, scoped, tag = 'scoped memory for neural_net_forward.1']
  %s0 = inlined_call_operand.vmem [shape: bf16[128,32], index: 0, kind: input, shape index: {}]
  %s1 = inlined_call_operand.vmem [shape: bf16[32,512], index: 1, kind: input, shape index: {}]
  %s2 = inlined_call_operand.vmem [shape: f32[1,512], index: 2, kind: input, shape index: {}]
  %s3 = inlined_call_operand.vmem [shape: f32[1,512], index: 3, kind: input, shape index: {}]
  %s4 = inlined_call_operand.<no memory space> [shape: f32[1], index: 4, kind: input, shape index: {}]
  %s5 = inlined_call_operand.vmem [shape: f32[1,128], index: 5, kind: output, shape index: {}]
  %s6 = sld [smem:[#allocation0]]
  $region30: #{neural_net_forward.1} parent=0
    _
  %s8 = ssub.s32 1, %s6
  %s9 = scalar_select 0, %s8, %s6
  %10 = sst [smem:[#allocation2]] %s4
  // Predicated region
  $region2: #{neural_net_forward.1} parent=0 // pred_check
    _
  $region3: #{neural_net_forward.1} parent=0 // pred_check_branch
    %12 = sbr.rel (0) target = $region5
  $region4: #{neural_net_forward.1} parent=0 // pred_region
    _
  $region5: #{neural_net_forward.1} parent=0 // pred_fallthru
    _
  // Predicated region
  $region6: #{neural_net_forward.1} parent=0 // pred_check
    _
  $region7: #{neural_net_forward.1} parent=0 // pred_check_branch
    %14 = sbr.rel (0) target = $region9
  $region8: #{neural_net_forward.1} parent=0 // pred_region
    _
  $region9: #{neural_net_forward.1} parent=0 // pred_fallthru
    _
  // Predicated region
  $region10: #{neural_net_forward.1} parent=0 // pred_check
    _
  $region11: #{neural_net_forward.1} parent=0 // pred_check_branch
    %16 = sbr.rel (0) target = $region13
  $region12: #{neural_net_forward.1} parent=0 // pred_region
    _
  $region13: #{neural_net_forward.1} parent=0 // pred_fallthru
    _
  // Predicated region
  $region14: #{neural_net_forward.1} parent=0 // pred_check
    _
  $region15: #{neural_net_forward.1} parent=0 // pred_check_branch
    %18 = sbr.rel (0) target = $region17
  $region16: #{neural_net_forward.1} parent=0 // pred_region
    _
  $region17: #{neural_net_forward.1} parent=0 // pred_fallthru
    _
  // Predicated region
  $region18: #{neural_net_forward.1} parent=0 // pred_check
    _
  $region19: #{neural_net_forward.1} parent=0 // pred_check_branch
    %20 = sbr.rel (0) target = $region21
  $region20: #{neural_net_forward.1} parent=0 // pred_region
    _
  $region21: #{neural_net_forward.1} parent=0 // pred_fallthru
    _
  %v22 = vld [vmem:[%s0] sm:$0xf]
  %v23 = vld [vmem:[%s0 + $0x4] sm:$0xf]
  %v24 = vld [vmem:[%s0 + $0x8] sm:$0xf]
  %v25 = vld [vmem:[%s0 + $0xc] sm:$0xf]
  %v26 = vld [vmem:[%s0 + $0x10] sm:$0xf]
  %v27 = vld [vmem:[%s0 + $0x14] sm:$0xf]
  %v28 = vld [vmem:[%s0 + $0x18] sm:$0xf]
  %v29 = vld [vmem:[%s0 + $0x1c] sm:$0xf]
  %v30 = vld [vmem:[%s0 + $0x20] sm:$0xf]
  %v31 = vld [vmem:[%s0 + $0x24] sm:$0xf]
  %v32 = vld [vmem:[%s0 + $0x28] sm:$0xf]
  %v33 = vld [vmem:[%s0 + $0x2c] sm:$0xf]
  %v34 = vld [vmem:[%s0 + $0x30] sm:$0xf]
  %v35 = vld [vmem:[%s0 + $0x34] sm:$0xf]
  %v36 = vld [vmem:[%s0 + $0x38] sm:$0xf]
  %v37 = vld [vmem:[%s0 + $0x3c] sm:$0xf]
  %v38 = vld [vmem:[%s1] sm:$0xff]
  %v39 = vld [vmem:[%s1 + $0x8] sm:$0xff]
  %v40 = vld [vmem:[%s1 + $0x10] sm:$0xff]
  %v41 = vld [vmem:[%s1 + $0x18] sm:$0xff]
  %v42 = vld [vmem:[%s1 + $0x20] sm:$0xff]
  %v43 = vld [vmem:[%s1 + $0x28] sm:$0xff]
  %v44 = vld [vmem:[%s1 + $0x30] sm:$0xff]
  %v45 = vld [vmem:[%s1 + $0x38] sm:$0xff]
  %v46 = vld [vmem:[%s2] sm:$0xf]
  %v48 = vlaneseq
  %v49 = vshrl.u32 %v48, 7
  %v50 = vsub.s32 0, %v49
  %v51 = vrot.slane %v46, %v50
  %v52 = vlaneseq
  %v53 = vshrl.u32 %v52, 7
  %v54 = vsub.s32 1, %v53
  %v55 = vrot.slane %v46, %v54
  %v56 = vlaneseq
  %v57 = vshrl.u32 %v56, 7
  %v58 = vsub.s32 2, %v57
  %v59 = vrot.slane %v46, %v58
  %v60 = vlaneseq
  %v61 = vshrl.u32 %v60, 7
  %v62 = vsub.s32 3, %v61
  %v63 = vrot.slane %v46, %v62
  %v84 = vunpack.c.l.b16 %v22
  %v85 = vunpack.c.l.b16 %v23
  %v86 = vunpack.c.l.b16 %v24
  %v87 = vunpack.c.l.b16 %v25
  %v88 = vunpack.c.l.b16 %v26
  %v89 = vunpack.c.l.b16 %v27
  %v90 = vunpack.c.l.b16 %v28
  %v91 = vunpack.c.l.b16 %v29
  %v92 = vunpack.c.l.b16 %v30
  %v93 = vunpack.c.l.b16 %v31
  %v94 = vunpack.c.l.b16 %v32
  %v95 = vunpack.c.l.b16 %v33
  %v96 = vunpack.c.l.b16 %v34
  %v97 = vunpack.c.l.b16 %v35
  %v98 = vunpack.c.l.b16 %v36
  %v99 = vunpack.c.l.b16 %v37
  %v100 = vpack.c.b16 %v85, %v84
  %v101 = vpack.c.b16 %v87, %v86
  %v102 = vpack.c.b16 %v89, %v88
  %v103 = vpack.c.b16 %v91, %v90
  %v104 = vpack.c.b16 %v93, %v92
  %v105 = vpack.c.b16 %v95, %v94
  %v106 = vpack.c.b16 %v97, %v96
  %v107 = vpack.c.b16 %v99, %v98
  %v116 = vunpack.c.l.b16 %v38
  %v117 = vunpack.c.h.b16 %v38
  %v118 = vunpack.c.l.b16 %v39
  %v119 = vunpack.c.h.b16 %v39
  %v120 = vunpack.c.l.b16 %v40
  %v121 = vunpack.c.h.b16 %v40
  %v122 = vunpack.c.l.b16 %v41
  %v123 = vunpack.c.h.b16 %v41
  %v124 = vunpack.c.l.b16 %v42
  %v125 = vunpack.c.h.b16 %v42
  %v126 = vunpack.c.l.b16 %v43
  %v127 = vunpack.c.h.b16 %v43
  %v128 = vunpack.c.l.b16 %v44
  %v129 = vunpack.c.h.b16 %v44
  %v130 = vunpack.c.l.b16 %v45
  %v131 = vunpack.c.h.b16 %v45
  %v132 = vpack.c.b16 %v120, %v116
  %v133 = vpack.c.b16 %v121, %v117
  %v134 = vpack.c.b16 %v122, %v118
  %v135 = vpack.c.b16 %v123, %v119
  %v136 = vpack.c.b16 %v128, %v124
  %v137 = vpack.c.b16 %v129, %v125
  %v138 = vpack.c.b16 %v130, %v126
  %v139 = vpack.c.b16 %v131, %v127
  %vm148 = vcmask 261120
  %v150 = vsel %vm148, %v100, 0
  %v153 = vsel %vm148, %v101, 0
  %v156 = vsel %vm148, %v102, 0
  %v159 = vsel %vm148, %v103, 0
  %v162 = vsel %vm148, %v104, 0
  %v165 = vsel %vm148, %v105, 0
  %v168 = vsel %vm148, %v106, 0
  %v171 = vsel %vm148, %v107, 0
  %173 = vmatprep.subr.bf16.mxu0 0
  %174 = vmatpush1.bf16.msra.mxu0 0
  %175 = vmatprep.subr.bf16.mxu0 0
  %176 = vmatpush1.bf16.msra.mxu0 0
  %177 = vmatprep.subr.bf16.mxu0 0
  %178 = vmatpush1.bf16.msra.mxu0 0
  %179 = vmatprep.subr.bf16.mxu0 0
  %180 = vmatpush1.bf16.msra.mxu0 0
  %181 = vmatprep.subr.bf16.mxu0 0
  %182 = vmatpush1.bf16.msra.mxu0 0
  %183 = vmatprep.subr.bf16.mxu0 0
  %184 = vmatpush1.bf16.msra.mxu0 0
  %185 = vmatprep.subr.bf16.mxu0 %v137
  %186 = vmatpush1.bf16.msra.mxu0 %v136
  %187 = vmatprep.subr.bf16.mxu0 %v133
  %188 = vmatpush1.bf16.msra.mxu0 %v132
  %189 = vmatprep.subr.bf16.mxu0 0
  %190 = vmatpush2.bf16.msra.mxu0 0
  %191 = vmatprep.subr.bf16.mxu0 0
  %192 = vmatpush2.bf16.msra.mxu0 0
  %193 = vmatprep.subr.bf16.mxu0 0
  %194 = vmatpush2.bf16.msra.mxu0 0
  %195 = vmatprep.subr.bf16.mxu0 0
  %196 = vmatpush2.bf16.msra.mxu0 0
  %197 = vmatprep.subr.bf16.mxu0 0
  %198 = vmatpush2.bf16.msra.mxu0 0
  %199 = vmatprep.subr.bf16.mxu0 0
  %200 = vmatpush2.bf16.msra.mxu0 0
  %201 = vmatprep.subr.bf16.mxu0 0
  %202 = vmatpush2.bf16.msra.mxu0 0
  %203 = vmatprep.subr.bf16.mxu0 0
  %204 = vmatpush2.bf16.msra.mxu0 0
  %205 = vmatprep.mubr.bf16.mxu0 0
  %206 = vmatmul.mubr.bf16.gmra.mxu0 %v150
  %v207 = vpop.f32.mrf.mxu0
  %v208 = vadd.f32 %v51, %v207
  %v209 = vpop.f32.mrf.mxu0
  %v210 = vadd.f32 %v55, %v209
  %v211 = vpop.f32.mrf.mxu0
  %v212 = vadd.f32 %v51, %v211
  %v213 = vpop.f32.mrf.mxu0
  %v214 = vadd.f32 %v55, %v213
  %215 = vmatprep.mubr.bf16.mxu0 0
  %216 = vmatmul.mubr.bf16.gmra.mxu0 %v153
  %v217 = vpop.f32.mrf.mxu0
  %v218 = vadd.f32 %v51, %v217
  %v219 = vpop.f32.mrf.mxu0
  %v220 = vadd.f32 %v55, %v219
  %v221 = vpop.f32.mrf.mxu0
  %v222 = vadd.f32 %v51, %v221
  %v223 = vpop.f32.mrf.mxu0
  %v224 = vadd.f32 %v55, %v223
  %225 = vmatprep.mubr.bf16.mxu0 0
  %226 = vmatmul.mubr.bf16.gmra.mxu0 %v156
  %v227 = vpop.f32.mrf.mxu0
  %v228 = vadd.f32 %v51, %v227
  %v229 = vpop.f32.mrf.mxu0
  %v230 = vadd.f32 %v55, %v229
  %v231 = vpop.f32.mrf.mxu0
  %v232 = vadd.f32 %v51, %v231
  %v233 = vpop.f32.mrf.mxu0
  %v234 = vadd.f32 %v55, %v233
  %235 = vmatprep.mubr.bf16.mxu0 0
  %236 = vmatmul.mubr.bf16.gmra.mxu0 %v159
  %v237 = vpop.f32.mrf.mxu0
  %v238 = vadd.f32 %v51, %v237
  %v239 = vpop.f32.mrf.mxu0
  %v240 = vadd.f32 %v55, %v239
  %v241 = vpop.f32.mrf.mxu0
  %v242 = vadd.f32 %v51, %v241
  %v243 = vpop.f32.mrf.mxu0
  %v244 = vadd.f32 %v55, %v243
  %245 = vmatprep.mubr.bf16.mxu0 0
  %246 = vmatmul.mubr.bf16.gmra.mxu0 %v162
  %v247 = vpop.f32.mrf.mxu0
  %v248 = vadd.f32 %v51, %v247
  %v249 = vpop.f32.mrf.mxu0
  %v250 = vadd.f32 %v55, %v249
  %v251 = vpop.f32.mrf.mxu0
  %v252 = vadd.f32 %v51, %v251
  %v253 = vpop.f32.mrf.mxu0
  %v254 = vadd.f32 %v55, %v253
  %255 = vmatprep.mubr.bf16.mxu0 0
  %256 = vmatmul.mubr.bf16.gmra.mxu0 %v165
  %v257 = vpop.f32.mrf.mxu0
  %v258 = vadd.f32 %v51, %v257
  %v259 = vpop.f32.mrf.mxu0
  %v260 = vadd.f32 %v55, %v259
  %v261 = vpop.f32.mrf.mxu0
  %v262 = vadd.f32 %v51, %v261
  %v263 = vpop.f32.mrf.mxu0
  %v264 = vadd.f32 %v55, %v263
  %265 = vmatprep.mubr.bf16.mxu0 0
  %266 = vmatmul.mubr.bf16.gmra.mxu0 %v168
  %v267 = vpop.f32.mrf.mxu0
  %v268 = vadd.f32 %v51, %v267
  %v269 = vpop.f32.mrf.mxu0
  %v270 = vadd.f32 %v55, %v269
  %v271 = vpop.f32.mrf.mxu0
  %v272 = vadd.f32 %v51, %v271
  %v273 = vpop.f32.mrf.mxu0
  %v274 = vadd.f32 %v55, %v273
  %275 = vmatprep.mubr.bf16.mxu0 0
  %276 = vmatmul.mubr.bf16.gmra.mxu0 %v171
  %v277 = vpop.f32.mrf.mxu0
  %v278 = vadd.f32 %v51, %v277
  %v279 = vpop.f32.mrf.mxu0
  %v280 = vadd.f32 %v55, %v279
  %v281 = vpop.f32.mrf.mxu0
  %v282 = vadd.f32 %v51, %v281
  %v283 = vpop.f32.mrf.mxu0
  %v284 = vadd.f32 %v55, %v283
  %285 = vdwg.mxu0
  %286 = vmatprep.subr.bf16.mxu0 0
  %287 = vmatpush1.bf16.msra.mxu0 0
  %288 = vmatprep.subr.bf16.mxu0 0
  %289 = vmatpush1.bf16.msra.mxu0 0
  %290 = vmatprep.subr.bf16.mxu0 0
  %291 = vmatpush1.bf16.msra.mxu0 0
  %292 = vmatprep.subr.bf16.mxu0 0
  %293 = vmatpush1.bf16.msra.mxu0 0
  %294 = vmatprep.subr.bf16.mxu0 0
  %295 = vmatpush1.bf16.msra.mxu0 0
  %296 = vmatprep.subr.bf16.mxu0 0
  %297 = vmatpush1.bf16.msra.mxu0 0
  %298 = vmatprep.subr.bf16.mxu0 %v139
  %299 = vmatpush1.bf16.msra.mxu0 %v138
  %300 = vmatprep.subr.bf16.mxu0 %v135
  %301 = vmatpush1.bf16.msra.mxu0 %v134
  %302 = vmatprep.subr.bf16.mxu0 0
  %303 = vmatpush2.bf16.msra.mxu0 0
  %304 = vmatprep.subr.bf16.mxu0 0
  %305 = vmatpush2.bf16.msra.mxu0 0
  %306 = vmatprep.subr.bf16.mxu0 0
  %307 = vmatpush2.bf16.msra.mxu0 0
  %308 = vmatprep.subr.bf16.mxu0 0
  %309 = vmatpush2.bf16.msra.mxu0 0
  %310 = vmatprep.subr.bf16.mxu0 0
  %311 = vmatpush2.bf16.msra.mxu0 0
  %312 = vmatprep.subr.bf16.mxu0 0
  %313 = vmatpush2.bf16.msra.mxu0 0
  %314 = vmatprep.subr.bf16.mxu0 0
  %315 = vmatpush2.bf16.msra.mxu0 0
  %316 = vmatprep.subr.bf16.mxu0 0
  %317 = vmatpush2.bf16.msra.mxu0 0
  %318 = vmatprep.mubr.bf16.mxu0 0
  %319 = vmatmul.mubr.bf16.gmra.mxu0 %v150
  %v320 = vpop.f32.mrf.mxu0
  %v321 = vadd.f32 %v59, %v320
  %v322 = vpop.f32.mrf.mxu0
  %v323 = vadd.f32 %v63, %v322
  %v324 = vpop.f32.mrf.mxu0
  %v325 = vadd.f32 %v59, %v324
  %v326 = vpop.f32.mrf.mxu0
  %v327 = vadd.f32 %v63, %v326
  %328 = vmatprep.mubr.bf16.mxu0 0
  %329 = vmatmul.mubr.bf16.gmra.mxu0 %v153
  %v330 = vpop.f32.mrf.mxu0
  %v331 = vadd.f32 %v59, %v330
  %v332 = vpop.f32.mrf.mxu0
  %v333 = vadd.f32 %v63, %v332
  %v334 = vpop.f32.mrf.mxu0
  %v335 = vadd.f32 %v59, %v334
  %v336 = vpop.f32.mrf.mxu0
  %v337 = vadd.f32 %v63, %v336
  %338 = vmatprep.mubr.bf16.mxu0 0
  %339 = vmatmul.mubr.bf16.gmra.mxu0 %v156
  %v340 = vpop.f32.mrf.mxu0
  %v341 = vadd.f32 %v59, %v340
  %v342 = vpop.f32.mrf.mxu0
  %v343 = vadd.f32 %v63, %v342
  %v344 = vpop.f32.mrf.mxu0
  %v345 = vadd.f32 %v59, %v344
  %v346 = vpop.f32.mrf.mxu0
  %v347 = vadd.f32 %v63, %v346
  %348 = vmatprep.mubr.bf16.mxu0 0
  %349 = vmatmul.mubr.bf16.gmra.mxu0 %v159
  %v350 = vpop.f32.mrf.mxu0
  %v351 = vadd.f32 %v59, %v350
  %v352 = vpop.f32.mrf.mxu0
  %v353 = vadd.f32 %v63, %v352
  %v354 = vpop.f32.mrf.mxu0
  %v355 = vadd.f32 %v59, %v354
  %v356 = vpop.f32.mrf.mxu0
  %v357 = vadd.f32 %v63, %v356
  %358 = vmatprep.mubr.bf16.mxu0 0
  %359 = vmatmul.mubr.bf16.gmra.mxu0 %v162
  %v360 = vpop.f32.mrf.mxu0
  %v361 = vadd.f32 %v59, %v360
  %v362 = vpop.f32.mrf.mxu0
  %v363 = vadd.f32 %v63, %v362
  %v364 = vpop.f32.mrf.mxu0
  %v365 = vadd.f32 %v59, %v364
  %v366 = vpop.f32.mrf.mxu0
  %v367 = vadd.f32 %v63, %v366
  %368 = vmatprep.mubr.bf16.mxu0 0
  %369 = vmatmul.mubr.bf16.gmra.mxu0 %v165
  %v370 = vpop.f32.mrf.mxu0
  %v371 = vadd.f32 %v59, %v370
  %v372 = vpop.f32.mrf.mxu0
  %v373 = vadd.f32 %v63, %v372
  %v374 = vpop.f32.mrf.mxu0
  %v375 = vadd.f32 %v59, %v374
  %v376 = vpop.f32.mrf.mxu0
  %v377 = vadd.f32 %v63, %v376
  %378 = vmatprep.mubr.bf16.mxu0 0
  %379 = vmatmul.mubr.bf16.gmra.mxu0 %v168
  %v380 = vpop.f32.mrf.mxu0
  %v381 = vadd.f32 %v59, %v380
  %v382 = vpop.f32.mrf.mxu0
  %v383 = vadd.f32 %v63, %v382
  %v384 = vpop.f32.mrf.mxu0
  %v385 = vadd.f32 %v59, %v384
  %v386 = vpop.f32.mrf.mxu0
  %v387 = vadd.f32 %v63, %v386
  %388 = vmatprep.mubr.bf16.mxu0 0
  %389 = vmatmul.mubr.bf16.gmra.mxu0 %v171
  %v390 = vpop.f32.mrf.mxu0
  %v391 = vadd.f32 %v59, %v390
  %v392 = vpop.f32.mrf.mxu0
  %v393 = vadd.f32 %v63, %v392
  %v394 = vpop.f32.mrf.mxu0
  %v395 = vadd.f32 %v59, %v394
  %v396 = vpop.f32.mrf.mxu0
  %v397 = vadd.f32 %v63, %v396
  %398 = vdwg.mxu0
  %v399 = vmax.f32 %v208, 0.0
  %v400 = vmax.f32 %v210, 0.0
  %v401 = vmax.f32 %v321, 0.0
  %v402 = vmax.f32 %v323, 0.0
  %v403 = vmax.f32 %v212, 0.0
  %v404 = vmax.f32 %v214, 0.0
  %v405 = vmax.f32 %v325, 0.0
  %v406 = vmax.f32 %v327, 0.0
  %v407 = vmax.f32 %v218, 0.0
  %v408 = vmax.f32 %v220, 0.0
  %v409 = vmax.f32 %v331, 0.0
  %v410 = vmax.f32 %v333, 0.0
  %v411 = vmax.f32 %v222, 0.0
  %v412 = vmax.f32 %v224, 0.0
  %v413 = vmax.f32 %v335, 0.0
  %v414 = vmax.f32 %v337, 0.0
  %v415 = vmax.f32 %v228, 0.0
  %v416 = vmax.f32 %v230, 0.0
  %v417 = vmax.f32 %v341, 0.0
  %v418 = vmax.f32 %v343, 0.0
  %v419 = vmax.f32 %v232, 0.0
  %v420 = vmax.f32 %v234, 0.0
  %v421 = vmax.f32 %v345, 0.0
  %v422 = vmax.f32 %v347, 0.0
  %v423 = vmax.f32 %v238, 0.0
  %v424 = vmax.f32 %v240, 0.0
  %v425 = vmax.f32 %v351, 0.0
  %v426 = vmax.f32 %v353, 0.0
  %v427 = vmax.f32 %v242, 0.0
  %v428 = vmax.f32 %v244, 0.0
  %v429 = vmax.f32 %v355, 0.0
  %v430 = vmax.f32 %v357, 0.0
  %v431 = vmax.f32 %v248, 0.0
  %v432 = vmax.f32 %v250, 0.0
  %v433 = vmax.f32 %v361, 0.0
  %v434 = vmax.f32 %v363, 0.0
  %v435 = vmax.f32 %v252, 0.0
  %v436 = vmax.f32 %v254, 0.0
  %v437 = vmax.f32 %v365, 0.0
  %v438 = vmax.f32 %v367, 0.0
  %v439 = vmax.f32 %v258, 0.0
  %v440 = vmax.f32 %v260, 0.0
  %v441 = vmax.f32 %v371, 0.0
  %v442 = vmax.f32 %v373, 0.0
  %v443 = vmax.f32 %v262, 0.0
  %v444 = vmax.f32 %v264, 0.0
  %v445 = vmax.f32 %v375, 0.0
  %v446 = vmax.f32 %v377, 0.0
  %v447 = vmax.f32 %v268, 0.0
  %v448 = vmax.f32 %v270, 0.0
  %v449 = vmax.f32 %v381, 0.0
  %v450 = vmax.f32 %v383, 0.0
  %v451 = vmax.f32 %v272, 0.0
  %v452 = vmax.f32 %v274, 0.0
  %v453 = vmax.f32 %v385, 0.0
  %v454 = vmax.f32 %v387, 0.0
  %v455 = vmax.f32 %v278, 0.0
  %v456 = vmax.f32 %v280, 0.0
  %v457 = vmax.f32 %v391, 0.0
  %v458 = vmax.f32 %v393, 0.0
  %v459 = vmax.f32 %v282, 0.0
  %v460 = vmax.f32 %v284, 0.0
  %v461 = vmax.f32 %v395, 0.0
  %v462 = vmax.f32 %v397, 0.0
  %v463 = vld [vmem:[%s3] sm:$0xf]
  %v465 = vlaneseq
  %v466 = vshrl.u32 %v465, 7
  %v467 = vsub.s32 0, %v466
  %v468 = vrot.slane %v463, %v467
  %v469 = vlaneseq
  %v470 = vshrl.u32 %v469, 7
  %v471 = vsub.s32 1, %v470
  %v472 = vrot.slane %v463, %v471
  %v473 = vlaneseq
  %v474 = vshrl.u32 %v473, 7
  %v475 = vsub.s32 2, %v474
  %v476 = vrot.slane %v463, %v475
  %v477 = vlaneseq
  %v478 = vshrl.u32 %v477, 7
  %v479 = vsub.s32 3, %v478
  %v480 = vrot.slane %v463, %v479
  %v485 = vmul.f32 %v399, %v468
  %v486 = vmul.f32 %v400, %v472
  %v487 = vmul.f32 %v401, %v476
  %v488 = vmul.f32 %v402, %v480
  %v489 = vmul.f32 %v403, %v468
  %v490 = vmul.f32 %v404, %v472
  %v491 = vmul.f32 %v405, %v476
  %v492 = vmul.f32 %v406, %v480
  %v493 = vmul.f32 %v407, %v468
  %v494 = vmul.f32 %v408, %v472
  %v495 = vmul.f32 %v409, %v476
  %v496 = vmul.f32 %v410, %v480
  %v497 = vmul.f32 %v411, %v468
  %v498 = vmul.f32 %v412, %v472
  %v499 = vmul.f32 %v413, %v476
  %v500 = vmul.f32 %v414, %v480
  %v501 = vmul.f32 %v415, %v468
  %v502 = vmul.f32 %v416, %v472
  %v503 = vmul.f32 %v417, %v476
  %v504 = vmul.f32 %v418, %v480
  %v505 = vmul.f32 %v419, %v468
  %v506 = vmul.f32 %v420, %v472
  %v507 = vmul.f32 %v421, %v476
  %v508 = vmul.f32 %v422, %v480
  %v509 = vmul.f32 %v423, %v468
  %v510 = vmul.f32 %v424, %v472
  %v511 = vmul.f32 %v425, %v476
  %v512 = vmul.f32 %v426, %v480
  %v513 = vmul.f32 %v427, %v468
  %v514 = vmul.f32 %v428, %v472
  %v515 = vmul.f32 %v429, %v476
  %v516 = vmul.f32 %v430, %v480
  %v517 = vmul.f32 %v431, %v468
  %v518 = vmul.f32 %v432, %v472
  %v519 = vmul.f32 %v433, %v476
  %v520 = vmul.f32 %v434, %v480
  %v521 = vmul.f32 %v435, %v468
  %v522 = vmul.f32 %v436, %v472
  %v523 = vmul.f32 %v437, %v476
  %v524 = vmul.f32 %v438, %v480
  %v525 = vmul.f32 %v439, %v468
  %v526 = vmul.f32 %v440, %v472
  %v527 = vmul.f32 %v441, %v476
  %v528 = vmul.f32 %v442, %v480
  %v529 = vmul.f32 %v443, %v468
  %v530 = vmul.f32 %v444, %v472
  %v531 = vmul.f32 %v445, %v476
  %v532 = vmul.f32 %v446, %v480
  %v533 = vmul.f32 %v447, %v468
  %v534 = vmul.f32 %v448, %v472
  %v535 = vmul.f32 %v449, %v476
  %v536 = vmul.f32 %v450, %v480
  %v537 = vmul.f32 %v451, %v468
  %v538 = vmul.f32 %v452, %v472
  %v539 = vmul.f32 %v453, %v476
  %v540 = vmul.f32 %v454, %v480
  %v541 = vmul.f32 %v455, %v468
  %v542 = vmul.f32 %v456, %v472
  %v543 = vmul.f32 %v457, %v476
  %v544 = vmul.f32 %v458, %v480
  %v545 = vmul.f32 %v459, %v468
  %v546 = vmul.f32 %v460, %v472
  %v547 = vmul.f32 %v461, %v476
  %v548 = vmul.f32 %v462, %v480
  %v549 = vadd.f32 %v485, %v486
  %v550 = vadd.f32 %v549, %v487
  %v551 = vadd.f32 %v550, %v488
  %552 = vadd.xlane.f32.xlu0 %v551
  %v553 = vpop.xlane.xlu0 %552
  %v554 = vadd.f32 %v489, %v490
  %v555 = vadd.f32 %v554, %v491
  %v556 = vadd.f32 %v555, %v492
  %557 = vadd.xlane.f32.xlu0 %v556
  %v558 = vpop.xlane.xlu0 %557
  %v559 = vadd.f32 %v493, %v494
  %v560 = vadd.f32 %v559, %v495
  %v561 = vadd.f32 %v560, %v496
  %562 = vadd.xlane.f32.xlu0 %v561
  %v563 = vpop.xlane.xlu0 %562
  %v564 = vadd.f32 %v497, %v498
  %v565 = vadd.f32 %v564, %v499
  %v566 = vadd.f32 %v565, %v500
  %567 = vadd.xlane.f32.xlu0 %v566
  %v568 = vpop.xlane.xlu0 %567
  %v569 = vadd.f32 %v501, %v502
  %v570 = vadd.f32 %v569, %v503
  %v571 = vadd.f32 %v570, %v504
  %572 = vadd.xlane.f32.xlu0 %v571
  %v573 = vpop.xlane.xlu0 %572
  %v574 = vadd.f32 %v505, %v506
  %v575 = vadd.f32 %v574, %v507
  %v576 = vadd.f32 %v575, %v508
  %577 = vadd.xlane.f32.xlu0 %v576
  %v578 = vpop.xlane.xlu0 %577
  %v579 = vadd.f32 %v509, %v510
  %v580 = vadd.f32 %v579, %v511
  %v581 = vadd.f32 %v580, %v512
  %582 = vadd.xlane.f32.xlu0 %v581
  %v583 = vpop.xlane.xlu0 %582
  %v584 = vadd.f32 %v513, %v514
  %v585 = vadd.f32 %v584, %v515
  %v586 = vadd.f32 %v585, %v516
  %587 = vadd.xlane.f32.xlu0 %v586
  %v588 = vpop.xlane.xlu0 %587
  %v589 = vadd.f32 %v517, %v518
  %v590 = vadd.f32 %v589, %v519
  %v591 = vadd.f32 %v590, %v520
  %592 = vadd.xlane.f32.xlu0 %v591
  %v593 = vpop.xlane.xlu0 %592
  %v594 = vadd.f32 %v521, %v522
  %v595 = vadd.f32 %v594, %v523
  %v596 = vadd.f32 %v595, %v524
  %597 = vadd.xlane.f32.xlu0 %v596
  %v598 = vpop.xlane.xlu0 %597
  %v599 = vadd.f32 %v525, %v526
  %v600 = vadd.f32 %v599, %v527
  %v601 = vadd.f32 %v600, %v528
  %602 = vadd.xlane.f32.xlu0 %v601
  %v603 = vpop.xlane.xlu0 %602
  %v604 = vadd.f32 %v529, %v530
  %v605 = vadd.f32 %v604, %v531
  %v606 = vadd.f32 %v605, %v532
  %607 = vadd.xlane.f32.xlu0 %v606
  %v608 = vpop.xlane.xlu0 %607
  %v609 = vadd.f32 %v533, %v534
  %v610 = vadd.f32 %v609, %v535
  %v611 = vadd.f32 %v610, %v536
  %612 = vadd.xlane.f32.xlu0 %v611
  %v613 = vpop.xlane.xlu0 %612
  %v614 = vadd.f32 %v537, %v538
  %v615 = vadd.f32 %v614, %v539
  %v616 = vadd.f32 %v615, %v540
  %617 = vadd.xlane.f32.xlu0 %v616
  %v618 = vpop.xlane.xlu0 %617
  %v619 = vadd.f32 %v541, %v542
  %v620 = vadd.f32 %v619, %v543
  %v621 = vadd.f32 %v620, %v544
  %622 = vadd.xlane.f32.xlu0 %v621
  %v623 = vpop.xlane.xlu0 %622
  %v624 = vadd.f32 %v545, %v546
  %v625 = vadd.f32 %v624, %v547
  %v626 = vadd.f32 %v625, %v548
  %627 = vadd.xlane.f32.xlu0 %v626
  %v628 = vpop.xlane.xlu0 %627
  %s629 = sld [smem:[#allocation2]]
  %v630 = vstv %s629
  %v631 = vadd.f32 %v553, %v630
  %v632 = vadd.f32 %v558, %v630
  %v633 = vadd.f32 %v563, %v630
  %v634 = vadd.f32 %v568, %v630
  %v635 = vadd.f32 %v573, %v630
  %v636 = vadd.f32 %v578, %v630
  %v637 = vadd.f32 %v583, %v630
  %v638 = vadd.f32 %v588, %v630
  %v639 = vadd.f32 %v593, %v630
  %v640 = vadd.f32 %v598, %v630
  %v641 = vadd.f32 %v603, %v630
  %v642 = vadd.f32 %v608, %v630
  %v643 = vadd.f32 %v613, %v630
  %v644 = vadd.f32 %v618, %v630
  %v645 = vadd.f32 %v623, %v630
  %v646 = vadd.f32 %v628, %v630
  %v663 = vlaneseq
  %v664 = vand.u32 %v663, 127
  %v665 = vlaneseq
  %v666 = vshrl.u32 %v665, 7
  %v667 = vsub.s32 %v664, %v666
  %v668 = vrot.slane %v631, %v667
  %v669 = vadd.s32 %v664, 4294967288
  %v670 = vlaneseq
  %v671 = vshrl.u32 %v670, 7
  %v672 = vsub.s32 %v669, %v671
  %v673 = vrot.slane %v632, %v672
  %vm674 = vcmask 130112
  %v675 = vsel %vm674, %v673, %v668
  %v676 = vadd.s32 %v664, 4294967280
  %v677 = vlaneseq
  %v678 = vshrl.u32 %v677, 7
  %v679 = vsub.s32 %v676, %v678
  %v680 = vrot.slane %v633, %v679
  %vm681 = vcmask 195712
  %v682 = vsel %vm681, %v680, %v675
  %v683 = vadd.s32 %v664, 4294967272
  %v684 = vlaneseq
  %v685 = vshrl.u32 %v684, 7
  %v686 = vsub.s32 %v683, %v685
  %v687 = vrot.slane %v634, %v686
  %vm688 = vcmask 261312
  %v689 = vsel %vm688, %v687, %v682
  %v690 = vadd.s32 %v664, 4294967264
  %v691 = vlaneseq
  %v692 = vshrl.u32 %v691, 7
  %v693 = vsub.s32 %v690, %v692
  %v694 = vrot.slane %v635, %v693
  %vm695 = vcmask 326912
  %v696 = vsel %vm695, %v694, %v689
  %v697 = vadd.s32 %v664, 4294967256
  %v698 = vlaneseq
  %v699 = vshrl.u32 %v698, 7
  %v700 = vsub.s32 %v697, %v699
  %v701 = vrot.slane %v636, %v700
  %vm702 = vcmask 392512
  %v703 = vsel %vm702, %v701, %v696
  %v704 = vadd.s32 %v664, 4294967248
  %v705 = vlaneseq
  %v706 = vshrl.u32 %v705, 7
  %v707 = vsub.s32 %v704, %v706
  %v708 = vrot.slane %v637, %v707
  %vm709 = vcmask 458112
  %v710 = vsel %vm709, %v708, %v703
  %v711 = vadd.s32 %v664, 4294967240
  %v712 = vlaneseq
  %v713 = vshrl.u32 %v712, 7
  %v714 = vsub.s32 %v711, %v713
  %v715 = vrot.slane %v638, %v714
  %vm716 = vcmask 523712
  %v717 = vsel %vm716, %v715, %v710
  %v718 = vadd.s32 %v664, 4294967232
  %v719 = vlaneseq
  %v720 = vshrl.u32 %v719, 7
  %v721 = vsub.s32 %v718, %v720
  %v722 = vrot.slane %v639, %v721
  %vm723 = vcmask 589312
  %v724 = vsel %vm723, %v722, %v717
  %v725 = vadd.s32 %v664, 4294967224
  %v726 = vlaneseq
  %v727 = vshrl.u32 %v726, 7
  %v728 = vsub.s32 %v725, %v727
  %v729 = vrot.slane %v640, %v728
  %vm730 = vcmask 654912
  %v731 = vsel %vm730, %v729, %v724
  %v732 = vadd.s32 %v664, 4294967216
  %v733 = vlaneseq
  %v734 = vshrl.u32 %v733, 7
  %v735 = vsub.s32 %v732, %v734
  %v736 = vrot.slane %v641, %v735
  %vm737 = vcmask 720512
  %v738 = vsel %vm737, %v736, %v731
  %v739 = vadd.s32 %v664, 4294967208
  %v740 = vlaneseq
  %v741 = vshrl.u32 %v740, 7
  %v742 = vsub.s32 %v739, %v741
  %v743 = vrot.slane %v642, %v742
  %vm744 = vcmask 786112
  %v745 = vsel %vm744, %v743, %v738
  %v746 = vadd.s32 %v664, 4294967200
  %v747 = vlaneseq
  %v748 = vshrl.u32 %v747, 7
  %v749 = vsub.s32 %v746, %v748
  %v750 = vrot.slane %v643, %v749
  %vm751 = vcmask 851712
  %v752 = vsel %vm751, %v750, %v745
  %v753 = vadd.s32 %v664, 4294967192
  %v754 = vlaneseq
  %v755 = vshrl.u32 %v754, 7
  %v756 = vsub.s32 %v753, %v755
  %v757 = vrot.slane %v644, %v756
  %vm758 = vcmask 917312
  %v759 = vsel %vm758, %v757, %v752
  %v760 = vadd.s32 %v664, 4294967184
  %v761 = vlaneseq
  %v762 = vshrl.u32 %v761, 7
  %v763 = vsub.s32 %v760, %v762
  %v764 = vrot.slane %v645, %v763
  %vm765 = vcmask 982912
  %v766 = vsel %vm765, %v764, %v759
  %v767 = vadd.s32 %v664, 4294967176
  %v768 = vlaneseq
  %v769 = vshrl.u32 %v768, 7
  %v770 = vsub.s32 %v767, %v769
  %v771 = vrot.slane %v646, %v770
  %vm772 = vcmask 1048512
  %v773 = vsel %vm772, %v771, %v766
  %775 = vst [vmem:[%s5] sm:$0x1] %v773
  // Predicated region
  $region22: #{neural_net_forward.1} parent=0 // pred_check
    _
  $region23: #{neural_net_forward.1} parent=0 // pred_check_branch
    %777 = sbr.rel (0) target = $region25
  $region24: #{neural_net_forward.1} parent=0 // pred_region
    _
  $region25: #{neural_net_forward.1} parent=0 // pred_fallthru
    _
  // Predicated region
  $region26: #{neural_net_forward.1} parent=0 // pred_check
    _
  $region27: #{neural_net_forward.1} parent=0 // pred_check_branch
    %779 = sbr.rel (0) target = $region29
  $region28: #{neural_net_forward.1} parent=0 // pred_region
    _
  $region29: #{neural_net_forward.1} parent=0 // pred_fallthru
    _

</llo_original>
